<compile_context>
chip_gen: v6e
topology: v6e:2x2x1
jax: 0.10.0
libtpu: 0.0.40
codegen_flags: <defaults>
</compile_context>

<pallas_src>
import jax
import jax.numpy as jnp
from jax.experimental import pallas as pl
from jax.experimental.pallas import tpu as pltpu

_LANE = 128


def _pos_enc_kernel(x_ref, pos_ref, o_ref):
    # x_ref/o_ref: (TB, TS, TE); pos_ref: (1, TS, TE) -> broadcast over batch.
    # In-kernel cast (no separate XLA cast pass over pos in the wrapper).
    o_ref[...] = x_ref[...].astype(o_ref.dtype) + pos_ref[...].astype(o_ref.dtype)


def _vmem_budget():
    """(per-buffer tile bytes, scoped vmem limit bytes), gated by generation."""
    tile_bytes = 2 * 1024 * 1024       # safe everywhere, incl. v7x (64 MiB VMEM)
    limit_bytes = 32 * 1024 * 1024
    try:
        cap = getattr(pltpu.get_tpu_info(), "vmem_capacity_bytes", 0) or 0
        if cap >= 100 * 1024 * 1024:   # v5e / v6e: 128 MiB physical VMEM
            tile_bytes = 4 * 1024 * 1024
            limit_bytes = 64 * 1024 * 1024
    except Exception:
        pass
    return tile_bytes, limit_bytes


def _choose_tile(batch, seq_len, enc_dim, itemsize, pack, tile_bytes):
    """Pick a (TB, TS, TE) block.

    Legality: TE is the full enc_dim or a multiple of 128; TS is the full
    seq_len or a multiple of the sublane pack; TB (leading dim) is
    unconstrained.  Block stays within ~tile_bytes per buffer.
    """
    target_elems = max(tile_bytes // itemsize, pack * _LANE)

    # Lane (minor) dim: keep full enc_dim unless even a single pack-row slab
    # would blow the budget; then tile it in 128-lane multiples.
    if pack * enc_dim <= target_elems or enc_dim <= _LANE:
        te = enc_dim
    else:
        te = max(_LANE, min(enc_dim, (target_elems // pack // _LANE) * _LANE))

    # Sublane (second-minor) dim: full seq_len if it fits, otherwise the
    # largest pack multiple inside the budget.  (rows_budget >= pack by
    # construction of te / target_elems.)
    rows_budget = max(1, target_elems // te)
    if seq_len <= rows_budget or seq_len <= pack:
        ts = seq_len
    else:
        ts = max(pack, (rows_budget // pack) * pack)

    # Leading batch dim: no layout constraint; fill the remaining budget so
    # large-batch / small-row inputs don't pay per-grid-step overhead.
    tb = max(1, min(batch, target_elems // (ts * te)))
    return tb, ts, te


def pos_enc(x, pos_embeddings):
    """Add learnable positional embeddings to x.

    Args:
        x: (batch, seq_len, enc_dim)
        pos_embeddings: (1, seq_len, enc_dim)

    Returns:
        (batch, seq_len, enc_dim) in the promoted dtype of (x, pos_embeddings).
    """
    batch, seq_len, enc_dim = x.shape
    assert pos_embeddings.shape == (1, seq_len, enc_dim)

    out_dtype = jnp.promote_types(x.dtype, pos_embeddings.dtype)
    x_item = jnp.dtype(x.dtype).itemsize
    p_item = jnp.dtype(pos_embeddings.dtype).itemsize
    o_item = jnp.dtype(out_dtype).itemsize

    # Sublane pack from the narrowest operand dtype; budget from the widest.
    pack = 8 * max(1, 4 // min(x_item, p_item, o_item))
    tile_bytes, limit_bytes = _vmem_budget()
    tb, ts, te = _choose_tile(batch, seq_len, enc_dim,
                              max(x_item, p_item, o_item), pack, tile_bytes)

    e_blocks = pl.cdiv(enc_dim, te)
    s_blocks = pl.cdiv(seq_len, ts)
    b_blocks = pl.cdiv(batch, tb)

    # v7x: if everything fits in one block, split batch in two so both
    # TensorCores get work (no effect on single-TC v5e/v6e beyond one extra
    # ~0.35us grid step).
    if e_blocks * s_blocks * b_blocks == 1 and batch >= 2:
        tb = pl.cdiv(batch, 2)
        b_blocks = pl.cdiv(batch, tb)

    # Batch innermost: pos block index (0, s, e) is constant across the inner
    # loop, so its (single) tile stays resident in VMEM.
    grid = (e_blocks, s_blocks, b_blocks)

    n = batch * seq_len * enc_dim
    cost = pl.CostEstimate(
        flops=n,
        transcendentals=0,
        bytes_accessed=n * (x_item + o_item) + seq_len * enc_dim * p_item,
    )

    return pl.pallas_call(
        _pos_enc_kernel,
        out_shape=jax.ShapeDtypeStruct((batch, seq_len, enc_dim), out_dtype),
        grid_spec=pltpu.PrefetchScalarGridSpec(
            num_scalar_prefetch=0,
            grid=grid,
            in_specs=[
                pl.BlockSpec((tb, ts, te), lambda e, s, b: (b, s, e)),   # x
                pl.BlockSpec((1, ts, te), lambda e, s, b: (0, s, e)),    # pos
            ],
            out_specs=pl.BlockSpec((tb, ts, te), lambda e, s, b: (b, s, e)),
        ),
        compiler_params=pltpu.CompilerParams(
            dimension_semantics=("parallel", "parallel", "parallel"),
            vmem_limit_bytes=limit_bytes,
        ),
        cost_estimate=cost,
    )(x, pos_embeddings)


if __name__ == "__main__":
    key = jax.random.PRNGKey(0)
    kx, kp, kx2, kp2, kx3, kp3 = jax.random.split(key, 6)

    # Small shapes consistent with the module: batch=2, seq_len=8, enc_dim=32.
    batch, seq_len, enc_dim = 2, 8, 32
    x = jax.random.normal(kx, (batch, seq_len, enc_dim), dtype=jnp.float32)
    pos_embeddings = jax.random.normal(kp, (1, seq_len, enc_dim), dtype=jnp.float32)

    out = jax.block_until_ready(pos_enc(x, pos_embeddings))
    ref = x + pos_embeddings
    assert out.shape == ref.shape and out.dtype == ref.dtype
    assert jnp.allclose(out, ref, atol=1e-6, rtol=1e-6)

    # Larger shape: multi-block grid, pos kept resident across the inner
    # batch axis, sublane/lane-dense (TB, TS, TE) blocks.
    b2, s2, e2 = 16, 512, 256
    x_l = jax.random.normal(kx2, (b2, s2, e2), dtype=jnp.float32)
    pos_l = jax.random.normal(kp2, (1, s2, e2), dtype=jnp.float32)
    out_l = jax.block_until_ready(pos_enc(x_l, pos_l))
    assert jnp.allclose(out_l, x_l + pos_l, atol=1e-6, rtol=1e-6)

    # Mixed precision: bf16 activations + f32 positional parameter -> f32 out
    # (matches PyTorch type promotion; cast happens inside the kernel).
    x_m = jax.random.normal(kx3, (4, 64, 96), dtype=jnp.bfloat16)
    pos_m = jax.random.normal(kp3, (1, 64, 96), dtype=jnp.float32)
    out_m = jax.block_until_ready(pos_enc(x_m, pos_m))
    ref_m = x_m.astype(jnp.float32) + pos_m
    assert out_m.dtype == jnp.float32
    assert jnp.allclose(out_m, ref_m, atol=1e-6, rtol=1e-5)

    print("KERNEL_OK")
</pallas_src>

<mosaic_0001>
module attributes {stable_mosaic.version = 11 : i64} {
  func.func @_pos_enc_kernel(%arg0: i32, %arg1: i32, %arg2: i32, %arg3: memref<1x8x32xf32, #tpu.memory_space<vmem>>, %arg4: memref<1x8x32xf32, #tpu.memory_space<vmem>>, %arg5: memref<1x8x32xf32, #tpu.memory_space<vmem>>) attributes {dimension_semantics = [#tpu.dimension_semantics<parallel>, #tpu.dimension_semantics<parallel>, #tpu.dimension_semantics<parallel>], iteration_bounds = array<i64: 1, 1, 2>, scalar_prefetch = 0 : i64, scratch_operands = 0 : i64, tpu.core_type = #tpu.core_type<tc>, window_params = [{transform_indices = @transform_0, window_bounds = array<i64: 1, 8, 32>}, {transform_indices = @transform_1, window_bounds = array<i64: 1, 8, 32>}, {transform_indices = @transform_2, window_bounds = array<i64: 1, 8, 32>}]} {
    %c0 = arith.constant 0 : index
    %c0_0 = arith.constant 0 : index
    %c0_1 = arith.constant 0 : index
    %0 = vector.load %arg3[%c0, %c0_0, %c0_1] : memref<1x8x32xf32, #tpu.memory_space<vmem>>, vector<1x8x32xf32>
    %c0_2 = arith.constant 0 : index
    %c0_3 = arith.constant 0 : index
    %c0_4 = arith.constant 0 : index
    %1 = vector.load %arg4[%c0_2, %c0_3, %c0_4] : memref<1x8x32xf32, #tpu.memory_space<vmem>>, vector<1x8x32xf32>
    %2 = arith.addf %0, %1 : vector<1x8x32xf32>
    %c0_5 = arith.constant 0 : index
    %c0_6 = arith.constant 0 : index
    %c0_7 = arith.constant 0 : index
    %3 = vector.load %arg5[%c0_5, %c0_6, %c0_7] : memref<1x8x32xf32, #tpu.memory_space<vmem>>, vector<1x8x32xf32>
    tpu.vector_store %arg5[%c0_5, %c0_6, %c0_7], %2 {strides = array<i32>} : memref<1x8x32xf32, #tpu.memory_space<vmem>>, vector<1x8x32xf32>,
    return
  }
  func.func @transform_0(%arg0: i32, %arg1: i32, %arg2: i32) -> (i32, i32, i32) {
    %c0_i32 = arith.constant 0 : i32
    return %arg2, %arg1, %arg0 : i32, i32, i32
  }
  func.func @transform_1(%arg0: i32, %arg1: i32, %arg2: i32) -> (i32, i32, i32) {
    %c0_i32 = arith.constant 0 : i32
    %c0_i32_0 = arith.constant 0 : i32
    return %c0_i32, %arg1, %arg0 : i32, i32, i32
  }
  func.func @transform_2(%arg0: i32, %arg1: i32, %arg2: i32) -> (i32, i32, i32) {
    %c0_i32 = arith.constant 0 : i32
    return %arg2, %arg1, %arg0 : i32, i32, i32
  }
}

</mosaic_0001>

<llo_original>
// kernel: tpu_custom_call.1
$region0: #{tpu_custom_call.1}
  #allocation0 [shape = 'u32[]', space=smem, size = 0x4, offset = 0x4, fixed_abs, tag = 'smem constant byte address 0x4 - core index']
  #allocation1 [shape = 'u32[144,128]{1,0:T(1,128)}', space=vmem, size = 0x12000, scoped, tag = 'internal scratch']
  %s0 = inlined_call_operand.hbm [shape: f32[2,8,32], index: 0, kind: input, shape index: {}]
  %s1 = inlined_call_operand.hbm [shape: f32[1,8,32], index: 1, kind: input, shape index: {}]
  %s2 = inlined_call_operand.hbm [shape: f32[2,8,32], index: 2, kind: output, shape index: {}]
  %s3 = sld [smem:[#allocation0]]
  $region49: #{tpu_custom_call.1} parent=0
    _
  %s5 = ssub.s32 1, %s3
  %s6 = scalar_select 0, %s5, %s3
  $region1: #{tpu_custom_call.1} parent=0
    #allocation2 [shape = 'u8[8192]{0}', space=vmem, size = 0x2000, scoped, tag = 'input window, operand 0']
    #allocation3 [shape = 's32[2]{0}', space=sflag, size = 0x8, scoped, tag = 'scoped memory for tpu_custom_call.1']
    #allocation4 [shape = 's32[2]{0}', space=sflag, size = 0x8, scoped, tag = 'scoped memory for tpu_custom_call.1']
    #allocation5 [shape = 'u8[4096]{0}', space=vmem, size = 0x1000, scoped, tag = 'input window, operand 1, single buffered']
    #allocation6 [shape = 's32[1]{0}', space=sflag, size = 0x4, scoped, tag = 'scoped memory for tpu_custom_call.1']
    #allocation7 [shape = 'u8[8192]{0}', space=vmem, size = 0x2000, scoped, tag = 'output window, operand 0']
    %7 = vsyncpa [#allocation3], 0
    %s8 = scalar_lea.sflag [#allocation3], 1
    %9 = vsyncpa %s8, 0
    %10 = vsyncpa [#allocation6], 0
    %11 = vsyncpa [#allocation4], 0
    %s12 = scalar_lea.sflag [#allocation4], 1
    %13 = vsyncpa %s12, 0
    loop: start=0, step=1, limit=4
    $region2: #{tpu_custom_call.1} parent=1 // loop_pre_header
      _
    $region3: #{tpu_custom_call.1} parent=1 // loop_header
      %s15 = sphi 0, %s19
      %p16 = scmp.ge.s32.totalorder %s15, 4
      %s22 = sphi 0, %s41
      %s23 = sphi 0, %s37
      %s24 = sphi 0, %s33
      %s25 = sphi 0, %s22
      %s26 = sphi 0, %s23
      %s27 = sphi 0, %s24
      %s28 = sphi 0, %s25
      %s29 = sphi 0, %s26
      %s30 = sphi 0, %s27
      %s48 = sphi 0, %s50
      %s51 = sphi 0, %s48
      %s52 = sphi 0, %s51
      %s68 = sphi 0, %s52
      %s76 = sphi 0, %s78
      %s79 = sphi 0, %s76
      %s80 = sphi 0, %s79
      %s96 = sphi 0, %s80
      %s106 = sphi 0, %s108
      %s109 = sphi 0, %s106
      %s110 = sphi 0, %s109
      %s126 = sphi 0, %s110
    $region4: #{tpu_custom_call.1} parent=1 // loop_header_branch
      %18 = sbr.rel (%p16) target = $region8
    $region5: #{tpu_custom_call.1} parent=1 // loop_body
      %s20 = ssub.s32 %s15, 1
      %s21 = ssub.s32 %s15, 2
      %s31 = sadd.s32 1, %s24
      %p32 = scmp.ge.s32.totalorder %s31, 2
      %s33 = scalar_select %p32, 0, %s31
      %s34 = sadd.s32 1, %s23
      %s35 = scalar_select %p32, %s34, %s23
      %p36 = scmp.ge.s32.totalorder %s35, 1
      %s37 = scalar_select %p36, 0, %s35
      %s38 = sadd.s32 1, %s22
      %s39 = scalar_select %p36, %s38, %s22
      %p40 = scmp.ge.s32.totalorder %s39, 1
      %s41 = scalar_select %p40, 0, %s39
      %s42 = ssub.s32 %s24, %s33
      %s43 = ssub.s32 %s23, %s37
      %s44 = sor.u32 %s42, %s43
      %s45 = ssub.s32 %s22, %s41
      %s46 = sor.u32 %s44, %s45
      %p47 = scmp.eq.s32.totalorder %s46, 0
      %s49 = sadd.s32 %s48, 1
      %s50 = scalar_select %p47, %s48, %s49
      %p53 = pneg %p47
      %p54 = scmp.eq.s32.totalorder %s15, 1
      %p55 = por %p53, %p54
      %p56 = scmp.ne.s32.totalorder %s48, %s51
      %p57 = scmp.eq.s32.totalorder %s15, 0
      %p58 = por %p56, %p57
      %p59 = scmp.ne.s32.totalorder %s48, %s51
      %p60 = scmp.eq.s32.totalorder %s20, 1
      %p61 = por %p59, %p60
      %p62 = scmp.ne.s32.totalorder %s51, %s52
      %p63 = scmp.eq.s32.totalorder %s20, 0
      %p64 = por %p62, %p63
      %p65 = scmp.ne.s32.totalorder %s51, %s52
      %p66 = scmp.eq.s32.totalorder %s21, 1
      %p67 = por %p65, %p66
      %p69 = scmp.ne.s32.totalorder %s52, %s68
      %p70 = scmp.eq.s32.totalorder %s21, 0
      %p71 = por %p69, %p70
      %s72 = ssub.s32 %s23, %s37
      %s73 = ssub.s32 %s22, %s41
      %s74 = sor.u32 %s72, %s73
      %p75 = scmp.eq.s32.totalorder %s74, 0
      %s77 = sadd.s32 %s76, 1
      %s78 = scalar_select %p75, %s76, %s77
      %p81 = pneg %p75
      %p82 = scmp.eq.s32.totalorder %s15, 1
      %p83 = por %p81, %p82
      %p84 = scmp.ne.s32.totalorder %s76, %s79
      %p85 = scmp.eq.s32.totalorder %s15, 0
      %p86 = por %p84, %p85
      %p87 = scmp.ne.s32.totalorder %s76, %s79
      %p88 = scmp.eq.s32.totalorder %s20, 1
      %p89 = por %p87, %p88
      %p90 = scmp.ne.s32.totalorder %s79, %s80
      %p91 = scmp.eq.s32.totalorder %s20, 0
      %p92 = por %p90, %p91
      %p93 = scmp.ne.s32.totalorder %s79, %s80
      %p94 = scmp.eq.s32.totalorder %s21, 1
      %p95 = por %p93, %p94
      %p97 = scmp.ne.s32.totalorder %s80, %s96
      %p98 = scmp.eq.s32.totalorder %s21, 0
      %p99 = por %p97, %p98
      %s100 = ssub.s32 %s24, %s33
      %s101 = ssub.s32 %s23, %s37
      %s102 = sor.u32 %s100, %s101
      %s103 = ssub.s32 %s22, %s41
      %s104 = sor.u32 %s102, %s103
      %p105 = scmp.eq.s32.totalorder %s104, 0
      %s107 = sadd.s32 %s106, 1
      %s108 = scalar_select %p105, %s106, %s107
      %p111 = pneg %p105
      %p112 = scmp.eq.s32.totalorder %s15, 1
      %p113 = por %p111, %p112
      %p114 = scmp.ne.s32.totalorder %s106, %s109
      %p115 = scmp.eq.s32.totalorder %s15, 0
      %p116 = por %p114, %p115
      %p117 = scmp.ne.s32.totalorder %s106, %s109
      %p118 = scmp.eq.s32.totalorder %s20, 1
      %p119 = por %p117, %p118
      %p120 = scmp.ne.s32.totalorder %s109, %s110
      %p121 = scmp.eq.s32.totalorder %s20, 0
      %p122 = por %p120, %p121
      %p123 = scmp.ne.s32.totalorder %s109, %s110
      %p124 = scmp.eq.s32.totalorder %s21, 1
      %p125 = por %p123, %p124
      %p127 = scmp.ne.s32.totalorder %s110, %s126
      %p128 = scmp.eq.s32.totalorder %s21, 0
      %p129 = por %p127, %p128
      %p130 = scmp.le.s32.totalorder 1, %s15
      %p131 = scmp.lt.s32.totalorder %s15, 3
      %p132 = pnand %p130, %p131
      %p133 = pneg %p132
      // Predicated region
      $region9: #{tpu_custom_call.1} parent=5 // pred_check
        _
      $region10: #{tpu_custom_call.1} parent=5 // pred_check_branch
        %135 = sbr.rel (%p132) target = $region12
      $region11: #{tpu_custom_call.1} parent=5 // pred_region
        %s136 = ssub.s32 %s15, 1
        // Predicated region
        $region13: #{tpu_custom_call.1} parent=11 // pred_check
          %p137 = pneg %p92
        $region14: #{tpu_custom_call.1} parent=11 // pred_check_branch
          %139 = sbr.rel (%p137) target = $region16
        $region15: #{tpu_custom_call.1} parent=11 // pred_region
          %s141 = ssub.s32 128, 128
          %142 = vsyncadd [#allocation6], %s141
          %s143 = sadd.s32 %s25, %s26
          %s144 = smul.addr %s143, 128
          %s145 = scalar_lea.hbm %s1, %s144
          %s147 = sshll.u32 [#allocation5], 4
          %s148 = int_to_ptr.vmem [resolvable:$true] %s147
          %150 = dma.hbm_to_vmem [thread:$0]  %s145, 128, %s148, [#allocation6]
        $region16: #{tpu_custom_call.1} parent=11 // pred_fallthru
          _
      $region12: #{tpu_custom_call.1} parent=5 // pred_fallthru
        _
      %p151 = scmp.lt.s32.totalorder %s15, 2
      // Predicated region
      $region17: #{tpu_custom_call.1} parent=5 // pred_check
        %p152 = pneg %p151
      $region18: #{tpu_custom_call.1} parent=5 // pred_check_branch
        %154 = sbr.rel (%p152) target = $region20
      $region19: #{tpu_custom_call.1} parent=5 // pred_region
        // Predicated region
        $region21: #{tpu_custom_call.1} parent=19 // pred_check
          %p155 = pneg %p58
        $region22: #{tpu_custom_call.1} parent=19 // pred_check_branch
          %157 = sbr.rel (%p155) target = $region24
        $region23: #{tpu_custom_call.1} parent=19 // pred_region
          %s158 = sand.u32 %s48, 1
          %s159 = scalar_lea.sflag [#allocation3], %s158
          %s160 = sand.u32 %s48, 1
          %s161 = smul.addr %s160, 8
          %s162 = scalar_lea.vmem [#allocation2], %s161
          %s164 = ssub.s32 128, 128
          %165 = vsyncadd %s159, %s164
          %s166 = sadd.s32 %s22, %s23
          %s167 = sadd.s32 %s166, %s24
          %s168 = smul.addr %s167, 128
          %s169 = scalar_lea.hbm %s0, %s168
          %s171 = sshll.u32 %s162, 4
          %s172 = int_to_ptr.vmem [resolvable:$true] %s171
          %174 = dma.hbm_to_vmem [thread:$0]  %s169, 128, %s172, %s159
        $region24: #{tpu_custom_call.1} parent=19 // pred_fallthru
          _
      $region20: #{tpu_custom_call.1} parent=5 // pred_fallthru
        _
      %p175 = scmp.le.s32.totalorder 1, %s15
      %p176 = scmp.lt.s32.totalorder %s15, 3
      %p177 = pnand %p175, %p176
      %p178 = pneg %p177
      // Predicated region
      $region25: #{tpu_custom_call.1} parent=5 // pred_check
        _
      $region26: #{tpu_custom_call.1} parent=5 // pred_check_branch
        %180 = sbr.rel (%p177) target = $region28
      $region27: #{tpu_custom_call.1} parent=5 // pred_region
        %s181 = ssub.s32 %s15, 1
        %s182 = sand.u32 %s51, 1
        %s183 = scalar_lea.sflag [#allocation3], %s182
        %s184 = sand.u32 %s51, 1
        %s185 = smul.addr %s184, 8
        %s186 = scalar_lea.vmem [#allocation2], %s185
        // Predicated region
        $region29: #{tpu_custom_call.1} parent=27 // pred_check
          %p187 = pneg %p64
        $region30: #{tpu_custom_call.1} parent=27 // pred_check_branch
          %189 = sbr.rel (%p187) target = $region32
        $region31: #{tpu_custom_call.1} parent=27 // pred_region
          %190 = dma.done %s183, 128
        $region32: #{tpu_custom_call.1} parent=27 // pred_fallthru
          _
        // Predicated region
        $region33: #{tpu_custom_call.1} parent=27 // pred_check
          %p191 = pneg %p92
        $region34: #{tpu_custom_call.1} parent=27 // pred_check_branch
          %193 = sbr.rel (%p191) target = $region36
        $region35: #{tpu_custom_call.1} parent=27 // pred_region
          %194 = dma.done [#allocation6], 128
        $region36: #{tpu_custom_call.1} parent=27 // pred_fallthru
          _
        %s195 = sand.u32 %s51, 1
        %s196 = scalar_lea.sflag [#allocation3], %s195
        %s197 = sand.u32 %s51, 1
        %s198 = smul.addr %s197, 8
        %s199 = scalar_lea.vmem [#allocation2], %s198
        %p200 = pneg %p64
        %p201 = pneg %p61
        %p202 = pneg %p92
        %p203 = pneg %p89
        %p204 = pneg %p122
        %p205 = pneg %p119
        %s206 = sand.u32 %s109, 1
        %s207 = scalar_lea.sflag [#allocation4], %s206
        %s208 = sand.u32 %s109, 1
        %s209 = smul.addr %s208, 8
        %s210 = scalar_lea.vmem [#allocation7], %s209
        %v211 = vld [vmem:[%s186] sm:$0xff]
        %v212 = vld [vmem:[#allocation5] sm:$0xff]
        %v213 = vadd.f32 %v211, %v212
        %vm214 = vcmask 261120
        %215 = vst.msk [vmem:[%s210] sm:$0xff] %vm214, %v213
        %s216 = sand.u32 %s109, 1
        %s217 = scalar_lea.sflag [#allocation4], %s216
        %s218 = sand.u32 %s109, 1
        %s219 = smul.addr %s218, 8
        %s220 = scalar_lea.vmem [#allocation7], %s219
        // Predicated region
        $region37: #{tpu_custom_call.1} parent=27 // pred_check
          %p221 = pneg %p119
        $region38: #{tpu_custom_call.1} parent=27 // pred_check_branch
          %223 = sbr.rel (%p221) target = $region40
        $region39: #{tpu_custom_call.1} parent=27 // pred_region
          %s225 = ssub.s32 128, 128
          %226 = vsyncadd %s217, %s225
          %s227 = sadd.s32 %s25, %s26
          %s228 = sadd.s32 %s227, %s27
          %s229 = smul.addr %s228, 128
          %s230 = scalar_lea.hbm %s2, %s229
          %s232 = sshll.u32 %s220, 4
          %s233 = int_to_ptr.vmem [resolvable:$true] %s232
          %235 = dma.vmem_to_hbm [thread:$0]  %s233, 128, %s230, %s217
        $region40: #{tpu_custom_call.1} parent=27 // pred_fallthru
          _
      $region28: #{tpu_custom_call.1} parent=5 // pred_fallthru
        _
      %p236 = scmp.le.s32.totalorder 2, %s15
      // Predicated region
      $region41: #{tpu_custom_call.1} parent=5 // pred_check
        %p237 = pneg %p236
      $region42: #{tpu_custom_call.1} parent=5 // pred_check_branch
        %239 = sbr.rel (%p237) target = $region44
      $region43: #{tpu_custom_call.1} parent=5 // pred_region
        %s240 = ssub.s32 %s15, 2
        // Predicated region
        $region45: #{tpu_custom_call.1} parent=43 // pred_check
          %p241 = pneg %p125
        $region46: #{tpu_custom_call.1} parent=43 // pred_check_branch
          %243 = sbr.rel (%p241) target = $region48
        $region47: #{tpu_custom_call.1} parent=43 // pred_region
          %s244 = sand.u32 %s110, 1
          %s245 = scalar_lea.sflag [#allocation4], %s244
          %s246 = sand.u32 %s110, 1
          %s247 = smul.addr %s246, 8
          %s248 = scalar_lea.vmem [#allocation7], %s247
          %249 = dma.done %s245, 128
        $region48: #{tpu_custom_call.1} parent=43 // pred_fallthru
          _
      $region44: #{tpu_custom_call.1} parent=5 // pred_fallthru
        _
    $region6: #{tpu_custom_call.1} parent=1 // loop_footer
      %s19 = sadd.s32 1, %s15
    $region7: #{tpu_custom_call.1} parent=1 // loop_footer_branch
      %14 = sbr.rel target = $region3
    $region8: #{tpu_custom_call.1} parent=1 // loop_exit
      _
    %250 = vsyncpa [#allocation3], 1
    %s251 = scalar_lea.sflag [#allocation3], 1
    %252 = vsyncpa %s251, 1
    %253 = vsyncpa [#allocation6], 1
    %254 = vsyncpa [#allocation4], 1
    %s255 = scalar_lea.sflag [#allocation4], 1
    %256 = vsyncpa %s255, 1

</llo_original>
